<compile_context>
chip_gen: v7x
topology: tpu7x:2x2x1
jax: 0.10.0
libtpu: 0.0.40
codegen_flags: <defaults>
</compile_context>

<pallas_src>
import functools

import jax
import jax.numpy as jnp
from jax.experimental import pallas as pl
from jax.experimental.pallas import tpu as pltpu

_LANE = 128
_SMALL_C = 32          # below this the MXU is nearly idle -> VPU path
_VMEM_FRACTION = 0.75  # tile budget as a fraction of physical VMEM


# ----------------------------------------------------------------------------
# Hardware info (trace/compile time only).
# ----------------------------------------------------------------------------
@functools.lru_cache(maxsize=1)
def _tpu_info():
    """(physical VMEM bytes, TensorCores per chip), conservative fallbacks."""
    kind = ""
    try:
        kind = jax.devices()[0].device_kind.lower()
    except Exception:
        pass
    vmem = None
    try:
        vmem = int(getattr(pltpu.get_tpu_info(), "vmem_capacity_bytes", 0)) or None
    except Exception:
        vmem = None
    if vmem is None:
        if "v7" in kind:
            vmem = 64 << 20
        elif "v5" in kind or "v6" in kind:
            vmem = 128 << 20
        else:
            vmem = 64 << 20                      # conservative default
    n_tc = 2 if "v7" in kind else 1
    return vmem, n_tc


# ----------------------------------------------------------------------------
# Parameter folding (call ONCE at model-load time).
# ----------------------------------------------------------------------------
def _fold_bn(w_oi, b_o, gamma, beta, mean, var, eps=1e-5):
    """Fold inference-mode BatchNorm into a 1x1 conv (C_out, C_in)."""
    scale = gamma / jnp.sqrt(var + eps)                  # (C_out,)
    return w_oi * scale[:, None], (b_o - mean) * scale + beta


def fold_mhsa_params(params, matmul_dtype=None, eps=1e-5):
    """Fold BN into the convs and fuse Wx+Wg.  Hoisted out of the hot path.

    relu(BNx(conv_x(x)) + BNg(conv_g(x))) == relu((Wx_f + Wg_f) @ x + (bx_f + bg_f))
    so the first two 1x1 convs collapse into one matmul, exactly.
    """
    C = params["wx"].shape[0]
    if matmul_dtype is None:
        # bf16 MXU operands by default (f32 accumulation); exact f32 for the
        # small-C VPU path where bf16 buys nothing.
        matmul_dtype = jnp.float32 if C <= _SMALL_C else jnp.bfloat16

    wx, bx = _fold_bn(params["wx"], params["bx"], params["gx"], params["betx"],
                      params["mx"], params["vx"], eps)
    wg, bg = _fold_bn(params["wg"], params["bg"], params["gg"], params["betg"],
                      params["mg"], params["vg"], eps)
    w1, b1 = _fold_bn(params["w1"], params["b1"], params["g1"], params["bet1"],
                      params["m1"], params["v1"], eps)

    return {
        "w01": (wx + wg).astype(matmul_dtype),               # (C, C) fused
        "b01": (bx + bg).astype(jnp.float32).reshape(C, 1),  # (C, 1)
        "w1": w1.astype(matmul_dtype),                       # (C, C)
        "b1": b1.astype(jnp.float32).reshape(C, 1),          # (C, 1)
    }


# ----------------------------------------------------------------------------
# Kernel.
# ----------------------------------------------------------------------------
def _vpu_matmul(w, x):
    """W(C_out, C_in) @ x(C_in, T) as C_in broadcast-MACs on the VPU (tiny C)."""
    acc = w[:, 0:1] * x[0:1, :]
    for c in range(1, w.shape[1]):
        acc = acc + w[:, c:c + 1] * x[c:c + 1, :]
    return acc


def _mhsa_kernel(x_ref, w01_ref, b01_ref, w1_ref, b1_ref, o_ref, *, small_c):
    """One (batch, token-chunk) tile.

    x_ref / o_ref : (1, C, T) tile; tokens on the lane axis.
    w*_ref        : (C, C) folded (and Wx+Wg-fused) weights, matmul dtype.
    b*_ref        : (C, 1) folded biases, f32.
    """
    x1 = x_ref[0]                                           # (C, T), input dtype

    if small_c:
        # C is far below the MXU tile -> pure VPU formulation, exact f32.
        xf = x1.astype(jnp.float32)
        h = jnp.maximum(_vpu_matmul(w01_ref[...].astype(jnp.float32), xf)
                        + b01_ref[...], 0.0)
        a = jax.nn.sigmoid(_vpu_matmul(w1_ref[...].astype(jnp.float32), h)
                           + b1_ref[...])
        o_ref[0] = (xf * a).astype(o_ref.dtype)
    else:
        xm = x1.astype(w01_ref.dtype)                       # matmul-operand dtype
        h = jnp.dot(w01_ref[...], xm,
                    preferred_element_type=jnp.float32) + b01_ref[...]
        h = jnp.maximum(h, 0.0)                             # ReLU (VPU)
        a = jnp.dot(w1_ref[...], h.astype(w1_ref.dtype),
                    preferred_element_type=jnp.float32) + b1_ref[...]
        a = jax.nn.sigmoid(a)                               # EUP
        o_ref[0] = (x1.astype(jnp.float32) * a).astype(o_ref.dtype)


# ----------------------------------------------------------------------------
# Tile selection (VMEM- and generation-aware).
# ----------------------------------------------------------------------------
def _vmem_need(c, t, x_bytes, w_bytes):
    io = 2 * 2 * c * t * x_bytes                  # in + out tiles, double-buffered
    wts = 2 * 2 * (c * c * w_bytes + c * 4)       # 2 fused weights + biases, 2 bufs
    tmp = 5 * c * t * 4                           # cast copy + h/a/gate f32 temps
    return io + wts + tmp


def _pick_tile(hw, t_lane, c, x_bytes, w_bytes, budget, min_token_steps):
    """Lane-aligned token tile that fits the VMEM budget, prefers dividing HW,
    and (on 2-TC chips with N == 1) guarantees >= 2 grid steps."""
    t_max = max(_LANE, (int(t_lane) // _LANE) * _LANE)
    while t_max > _LANE and _vmem_need(c, t_max, x_bytes, w_bytes) > budget:
        t_max -= _LANE

    if hw <= t_max and min_token_steps <= 1:
        return hw                         # full-extent block: always layout-legal

    if min_token_steps > 1:
        cap = -(-hw // min_token_steps)                   # cdiv
        cap = max(_LANE, -(-cap // _LANE) * _LANE)        # round up to lane width
        t_max = min(t_max, cap)
        if hw <= t_max:
            return hw                     # too small to usefully split

    # Prefer a tile that divides HW (no ragged, masked-store tail) as long as
    # it stays within 2x of the largest fitting tile.
    t = t_max
    while t >= max(_LANE, t_max // 2):
        if hw % t == 0:
            return t
        t -= _LANE
    return t_max


# ----------------------------------------------------------------------------
# pallas_call wrapper.
# ----------------------------------------------------------------------------
@functools.partial(jax.jit,
                   static_argnames=("t", "vmem_limit", "small_c", "alias_io"))
def _mhsa_impl(x_nchw, w01, b01, w1, b1, *, t, vmem_limit, small_c, alias_io):
    N, C, H, W = x_nchw.shape
    HW = H * W
    x3 = x_nchw.reshape(N, C, HW)         # NCHW kept: tokens land on lanes

    x_bytes = x_nchw.dtype.itemsize
    w_bytes = w01.dtype.itemsize
    T_total = N * HW
    cost = pl.CostEstimate(
        flops=2 * 2 * T_total * C * C + 4 * T_total * C,   # 2 fused matmuls + eltwise
        transcendentals=T_total * C,                        # sigmoid
        bytes_accessed=(2 * T_total * C * x_bytes
                        + 2 * C * C * w_bytes + 2 * C * 4),
    )

    tok_map = lambda n, i: (n, 0, i)
    const_map = lambda n, i: (0, 0)       # constant index -> weights stay resident

    out3 = pl.pallas_call(
        functools.partial(_mhsa_kernel, small_c=small_c),
        out_shape=jax.ShapeDtypeStruct((N, C, HW), x_nchw.dtype),
        grid_spec=pltpu.PrefetchScalarGridSpec(
            num_scalar_prefetch=0,
            grid=(N, pl.cdiv(HW, t)),
            in_specs=[
                pl.BlockSpec((1, C, t), tok_map),           # x tokens (lane-dense)
                pl.BlockSpec((C, C), const_map),            # Wx+Wg fused
                pl.BlockSpec((C, 1), const_map),            # bx+bg fused
                pl.BlockSpec((C, C), const_map),            # W1
                pl.BlockSpec((C, 1), const_map),            # b1
            ],
            out_specs=pl.BlockSpec((1, C, t), tok_map),
        ),
        compiler_params=pltpu.CompilerParams(
            dimension_semantics=("parallel", "parallel"),
            vmem_limit_bytes=vmem_limit),
        input_output_aliases=({0: 0} if alias_io else {}),
        cost_estimate=cost,
    )(x3, w01, b01, w1, b1)

    return out3.reshape(N, C, H, W)


def mhsa_pallas(x_nchw, folded, *, t_lane=2048, alias_io=False):
    """Fused MHSA attention-gate forward.

    x_nchw : (N, C, H, W) input (the gated skip feature x1).
    folded : output of fold_mhsa_params(params) (precomputed once).
    alias_io=True only if the caller truly donates x_nchw (otherwise XLA
    inserts a defensive copy, a net loss for this memory-bound kernel).
    """
    N, C, H, W = x_nchw.shape
    HW = H * W
    x_bytes = x_nchw.dtype.itemsize
    w_bytes = folded["w01"].dtype.itemsize
    small_c = C <= _SMALL_C

    vmem_cap, n_tc = _tpu_info()
    budget = int(vmem_cap * _VMEM_FRACTION)
    min_token_steps = 2 if (n_tc >= 2 and N == 1) else 1

    t = _pick_tile(HW, t_lane, C, x_bytes, w_bytes, budget, min_token_steps)
    need = _vmem_need(C, t, x_bytes, w_bytes)
    # Always pass an explicit limit (v5e default scoped VMEM is only 16 MiB),
    # with headroom for compiler internals but capped well below physical VMEM.
    vmem_limit = int(min(max(need + (4 << 20), 16 << 20), int(vmem_cap * 0.85)))

    return _mhsa_impl(x_nchw, folded["w01"], folded["b01"],
                      folded["w1"], folded["b1"],
                      t=t, vmem_limit=vmem_limit,
                      small_c=small_c, alias_io=alias_io)


# ----------------------------------------------------------------------------
# Pure-JAX reference (independent, unfused) and parameter init.
# ----------------------------------------------------------------------------
def _reference(x_nchw, params):
    N, C, H, W = x_nchw.shape
    x = x_nchw.reshape(N, C, H * W).astype(jnp.float32)

    wx, bx = _fold_bn(params["wx"], params["bx"], params["gx"], params["betx"],
                      params["mx"], params["vx"])
    wg, bg = _fold_bn(params["wg"], params["bg"], params["gg"], params["betg"],
                      params["mg"], params["vg"])
    w1, b1 = _fold_bn(params["w1"], params["b1"], params["g1"], params["bet1"],
                      params["m1"], params["v1"])

    xf = jnp.einsum("oc,nct->not", wx, x) + bx[None, :, None]
    gf = jnp.einsum("oc,nct->not", wg, x) + bg[None, :, None]
    h = jnp.maximum(xf + gf, 0.0)
    a = jax.nn.sigmoid(jnp.einsum("oc,nct->not", w1, h) + b1[None, :, None])
    y = (x * a).astype(x_nchw.dtype)
    return y.reshape(N, C, H, W)


def init_params(key, channels):
    ks = jax.random.split(key, 12)
    C = channels
    p = {}
    # Conv2d(C, C, kernel_size=1) weights, kernel dims squeezed: (C_out, C_in)
    p["wx"] = jax.random.normal(ks[0], (C, C), jnp.float32) * 0.1
    p["bx"] = jax.random.normal(ks[1], (C,), jnp.float32) * 0.1
    p["wg"] = jax.random.normal(ks[2], (C, C), jnp.float32) * 0.1
    p["bg"] = jax.random.normal(ks[3], (C,), jnp.float32) * 0.1
    p["w1"] = jax.random.normal(ks[4], (C, C), jnp.float32) * 0.1
    p["b1"] = jax.random.normal(ks[5], (C,), jnp.float32) * 0.1
    # BatchNorm2d params + running stats (inference mode)
    for name, kg, kb in (("x", 6, 7), ("g", 8, 9), ("1", 10, 11)):
        p["g" + name] = 1.0 + 0.1 * jax.random.normal(ks[kg], (C,), jnp.float32)
        p["bet" + name] = 0.1 * jax.random.normal(ks[kb], (C,), jnp.float32)
        p["m" + name] = jnp.zeros((C,), jnp.float32)
        p["v" + name] = jnp.ones((C,), jnp.float32)
    return p


if __name__ == "__main__":
    key = jax.random.PRNGKey(0)
    k_x, k_p, k_x2, k_p2 = jax.random.split(key, 4)

    # Small-C case (AFUNet attention-gate sized): exact f32 VPU path.
    N, C, H, W = 2, 4, 16, 16
    x = jax.random.normal(k_x, (N, C, H, W), jnp.float32)
    params = init_params(k_p, C)
    folded = fold_mhsa_params(params)                 # auto -> f32 / VPU path
    out = jax.block_until_ready(mhsa_pallas(x, folded))
    ref = _reference(x, params)
    assert out.shape == (N, C, H, W)
    assert jnp.allclose(out, ref, atol=1e-5, rtol=1e-5), "small-C mismatch vs reference"

    # Bottleneck-sized MHSA(128): MXU path, bf16 operands with f32 accumulation.
    N2, C2, H2, W2 = 2, 128, 8, 8
    x2 = jax.random.normal(k_x2, (N2, C2, H2, W2), jnp.float32)
    params2 = init_params(k_p2, C2)
    folded2 = fold_mhsa_params(params2)               # auto -> bf16 / MXU path
    out2 = jax.block_until_ready(mhsa_pallas(x2, folded2))
    ref2 = _reference(x2, params2)
    assert out2.shape == (N2, C2, H2, W2)
    assert jnp.allclose(out2, ref2, atol=5e-2, rtol=5e-2), "bf16 MXU mismatch vs reference"

    print("KERNEL_OK")
</pallas_src>

<mosaic_0001>
module attributes {stable_mosaic.version = 11 : i64} {
  func.func @_mhsa_kernel(%arg0: i32, %arg1: i32, %arg2: memref<1x4x256xf32, #tpu.memory_space<vmem>>, %arg3: memref<4x4xf32, #tpu.memory_space<vmem>>, %arg4: memref<4x1xf32, #tpu.memory_space<vmem>>, %arg5: memref<4x4xf32, #tpu.memory_space<vmem>>, %arg6: memref<4x1xf32, #tpu.memory_space<vmem>>, %arg7: memref<1x4x256xf32, #tpu.memory_space<vmem>>) attributes {dimension_semantics = [#tpu.dimension_semantics<parallel>, #tpu.dimension_semantics<parallel>], iteration_bounds = array<i64: 2, 1>, scalar_prefetch = 0 : i64, scratch_operands = 0 : i64, tpu.core_type = #tpu.core_type<tc>, window_params = [{transform_indices = @transform_0, window_bounds = array<i64: 1, 4, 256>}, {pipeline_mode = #tpu.pipeline_mode<synchronous>, transform_indices = @transform_1, window_bounds = array<i64: 4, 4>}, {pipeline_mode = #tpu.pipeline_mode<synchronous>, transform_indices = @transform_2, window_bounds = array<i64: 4, 1>}, {pipeline_mode = #tpu.pipeline_mode<synchronous>, transform_indices = @transform_3, window_bounds = array<i64: 4, 4>}, {pipeline_mode = #tpu.pipeline_mode<synchronous>, transform_indices = @transform_4, window_bounds = array<i64: 4, 1>}, {transform_indices = @transform_5, window_bounds = array<i64: 1, 4, 256>}]} {
    %c0 = arith.constant 0 : index
    %c0_0 = arith.constant 0 : index
    %c0_1 = arith.constant 0 : index
    %0 = vector.load %arg2[%c0, %c0_0, %c0_1] : memref<1x4x256xf32, #tpu.memory_space<vmem>>, vector<1x4x256xf32>
    %1 = vector.shape_cast %0 : vector<1x4x256xf32> to vector<4x256xf32>
    %c0_2 = arith.constant 0 : index
    %c0_3 = arith.constant 0 : index
    %2 = vector.load %arg3[%c0_2, %c0_3] : memref<4x4xf32, #tpu.memory_space<vmem>>, vector<4x4xf32>
    %3 = vector.extract_strided_slice %2 {offsets = [0, 0], sizes = [4, 1], strides = [1, 1]} : vector<4x4xf32> to vector<4x1xf32>
    %4 = vector.extract_strided_slice %1 {offsets = [0, 0], sizes = [1, 256], strides = [1, 1]} : vector<4x256xf32> to vector<1x256xf32>
    %5 = vector.broadcast %3 : vector<4x1xf32> to vector<4x256xf32>
    %6 = vector.broadcast %4 : vector<1x256xf32> to vector<4x256xf32>
    %7 = arith.mulf %5, %6 : vector<4x256xf32>
    %8 = vector.extract_strided_slice %2 {offsets = [0, 1], sizes = [4, 1], strides = [1, 1]} : vector<4x4xf32> to vector<4x1xf32>
    %9 = vector.extract_strided_slice %1 {offsets = [1, 0], sizes = [1, 256], strides = [1, 1]} : vector<4x256xf32> to vector<1x256xf32>
    %10 = vector.broadcast %8 : vector<4x1xf32> to vector<4x256xf32>
    %11 = vector.broadcast %9 : vector<1x256xf32> to vector<4x256xf32>
    %12 = arith.mulf %10, %11 : vector<4x256xf32>
    %13 = arith.addf %7, %12 : vector<4x256xf32>
    %14 = vector.extract_strided_slice %2 {offsets = [0, 2], sizes = [4, 1], strides = [1, 1]} : vector<4x4xf32> to vector<4x1xf32>
    %15 = vector.extract_strided_slice %1 {offsets = [2, 0], sizes = [1, 256], strides = [1, 1]} : vector<4x256xf32> to vector<1x256xf32>
    %16 = vector.broadcast %14 : vector<4x1xf32> to vector<4x256xf32>
    %17 = vector.broadcast %15 : vector<1x256xf32> to vector<4x256xf32>
    %18 = arith.mulf %16, %17 : vector<4x256xf32>
    %19 = arith.addf %13, %18 : vector<4x256xf32>
    %20 = vector.extract_strided_slice %2 {offsets = [0, 3], sizes = [4, 1], strides = [1, 1]} : vector<4x4xf32> to vector<4x1xf32>
    %21 = vector.extract_strided_slice %1 {offsets = [3, 0], sizes = [1, 256], strides = [1, 1]} : vector<4x256xf32> to vector<1x256xf32>
    %22 = vector.broadcast %20 : vector<4x1xf32> to vector<4x256xf32>
    %23 = vector.broadcast %21 : vector<1x256xf32> to vector<4x256xf32>
    %24 = arith.mulf %22, %23 : vector<4x256xf32>
    %25 = arith.addf %19, %24 : vector<4x256xf32>
    %c0_4 = arith.constant 0 : index
    %c0_5 = arith.constant 0 : index
    %26 = vector.load %arg4[%c0_4, %c0_5] : memref<4x1xf32, #tpu.memory_space<vmem>>, vector<4x1xf32>
    %27 = vector.broadcast %26 : vector<4x1xf32> to vector<4x256xf32>
    %28 = arith.addf %25, %27 : vector<4x256xf32>
    %cst = arith.constant 0.000000e+00 : f32
    %29 = vector.broadcast %cst : f32 to vector<4x256xf32>
    %30 = arith.maximumf %28, %29 : vector<4x256xf32>
    %c0_6 = arith.constant 0 : index
    %c0_7 = arith.constant 0 : index
    %31 = vector.load %arg5[%c0_6, %c0_7] : memref<4x4xf32, #tpu.memory_space<vmem>>, vector<4x4xf32>
    %32 = vector.extract_strided_slice %31 {offsets = [0, 0], sizes = [4, 1], strides = [1, 1]} : vector<4x4xf32> to vector<4x1xf32>
    %33 = vector.extract_strided_slice %30 {offsets = [0, 0], sizes = [1, 256], strides = [1, 1]} : vector<4x256xf32> to vector<1x256xf32>
    %34 = vector.broadcast %32 : vector<4x1xf32> to vector<4x256xf32>
    %35 = vector.broadcast %33 : vector<1x256xf32> to vector<4x256xf32>
    %36 = arith.mulf %34, %35 : vector<4x256xf32>
    %37 = vector.extract_strided_slice %31 {offsets = [0, 1], sizes = [4, 1], strides = [1, 1]} : vector<4x4xf32> to vector<4x1xf32>
    %38 = vector.extract_strided_slice %30 {offsets = [1, 0], sizes = [1, 256], strides = [1, 1]} : vector<4x256xf32> to vector<1x256xf32>
    %39 = vector.broadcast %37 : vector<4x1xf32> to vector<4x256xf32>
    %40 = vector.broadcast %38 : vector<1x256xf32> to vector<4x256xf32>
    %41 = arith.mulf %39, %40 : vector<4x256xf32>
    %42 = arith.addf %36, %41 : vector<4x256xf32>
    %43 = vector.extract_strided_slice %31 {offsets = [0, 2], sizes = [4, 1], strides = [1, 1]} : vector<4x4xf32> to vector<4x1xf32>
    %44 = vector.extract_strided_slice %30 {offsets = [2, 0], sizes = [1, 256], strides = [1, 1]} : vector<4x256xf32> to vector<1x256xf32>
    %45 = vector.broadcast %43 : vector<4x1xf32> to vector<4x256xf32>
    %46 = vector.broadcast %44 : vector<1x256xf32> to vector<4x256xf32>
    %47 = arith.mulf %45, %46 : vector<4x256xf32>
    %48 = arith.addf %42, %47 : vector<4x256xf32>
    %49 = vector.extract_strided_slice %31 {offsets = [0, 3], sizes = [4, 1], strides = [1, 1]} : vector<4x4xf32> to vector<4x1xf32>
    %50 = vector.extract_strided_slice %30 {offsets = [3, 0], sizes = [1, 256], strides = [1, 1]} : vector<4x256xf32> to vector<1x256xf32>
    %51 = vector.broadcast %49 : vector<4x1xf32> to vector<4x256xf32>
    %52 = vector.broadcast %50 : vector<1x256xf32> to vector<4x256xf32>
    %53 = arith.mulf %51, %52 : vector<4x256xf32>
    %54 = arith.addf %48, %53 : vector<4x256xf32>
    %c0_8 = arith.constant 0 : index
    %c0_9 = arith.constant 0 : index
    %55 = vector.load %arg6[%c0_8, %c0_9] : memref<4x1xf32, #tpu.memory_space<vmem>>, vector<4x1xf32>
    %56 = vector.broadcast %55 : vector<4x1xf32> to vector<4x256xf32>
    %57 = arith.addf %54, %56 : vector<4x256xf32>
    %58 = arith.negf %57 : vector<4x256xf32>
    %59 = math.exp %58 : vector<4x256xf32>
    %cst_10 = arith.constant 1.000000e+00 : f32
    %60 = vector.broadcast %cst_10 : f32 to vector<4x256xf32>
    %61 = arith.addf %60, %59 : vector<4x256xf32>
    %62 = arith.divf %60, %61 : vector<4x256xf32>
    %63 = arith.mulf %1, %62 : vector<4x256xf32>
    %c0_11 = arith.constant 0 : index
    %c0_12 = arith.constant 0 : index
    %c0_13 = arith.constant 0 : index
    %64 = vector.load %arg7[%c0_11, %c0_12, %c0_13] : memref<1x4x256xf32, #tpu.memory_space<vmem>>, vector<1x4x256xf32>
    %65 = vector.shape_cast %64 : vector<1x4x256xf32> to vector<4x256xf32>
    %66 = vector.shape_cast %63 : vector<4x256xf32> to vector<1x4x256xf32>
    tpu.vector_store %arg7[%c0_11, %c0_12, %c0_13], %66 {strides = array<i32>} : memref<1x4x256xf32, #tpu.memory_space<vmem>>, vector<1x4x256xf32>,
    return
  }
  func.func @transform_0(%arg0: i32, %arg1: i32) -> (i32, i32, i32) {
    %c0_i32 = arith.constant 0 : i32
    %c0_i32_0 = arith.constant 0 : i32
    return %arg0, %c0_i32, %arg1 : i32, i32, i32
  }
  func.func @transform_1(%arg0: i32, %arg1: i32) -> (i32, i32) {
    %c0_i32 = arith.constant 0 : i32
    %c0_i32_0 = arith.constant 0 : i32
    %c0_i32_1 = arith.constant 0 : i32
    return %c0_i32, %c0_i32_0 : i32, i32
  }
  func.func @transform_2(%arg0: i32, %arg1: i32) -> (i32, i32) {
    %c0_i32 = arith.constant 0 : i32
    %c0_i32_0 = arith.constant 0 : i32
    %c0_i32_1 = arith.constant 0 : i32
    return %c0_i32, %c0_i32_0 : i32, i32
  }
  func.func @transform_3(%arg0: i32, %arg1: i32) -> (i32, i32) {
    %c0_i32 = arith.constant 0 : i32
    %c0_i32_0 = arith.constant 0 : i32
    %c0_i32_1 = arith.constant 0 : i32
    return %c0_i32, %c0_i32_0 : i32, i32
  }
  func.func @transform_4(%arg0: i32, %arg1: i32) -> (i32, i32) {
    %c0_i32 = arith.constant 0 : i32
    %c0_i32_0 = arith.constant 0 : i32
    %c0_i32_1 = arith.constant 0 : i32
    return %c0_i32, %c0_i32_0 : i32, i32
  }
  func.func @transform_5(%arg0: i32, %arg1: i32) -> (i32, i32, i32) {
    %c0_i32 = arith.constant 0 : i32
    %c0_i32_0 = arith.constant 0 : i32
    return %arg0, %c0_i32, %arg1 : i32, i32, i32
  }
}

</mosaic_0001>

<llo_original>
// kernel: _mhsa_impl.1
$region0: #{_mhsa_impl.1}
  #allocation0 [shape = 'u32[]', space=smem, size = 0x4, offset = 0x4, fixed_abs, tag = 'smem constant byte address 0x4 - core index']
  #allocation1 [shape = 'u32[144,128]{1,0:T(1,128)}', space=vmem, size = 0x12000, scoped, tag = 'internal scratch']
  %s0 = inlined_call_operand.vmem [shape: f32[2,4,256], index: 0, kind: input, shape index: {}]
  %s1 = inlined_call_operand.vmem [shape: f32[4,4], index: 1, kind: input, shape index: {}]
  %s2 = inlined_call_operand.vmem [shape: f32[4,1], index: 2, kind: input, shape index: {}]
  %s3 = inlined_call_operand.vmem [shape: f32[4,4], index: 3, kind: input, shape index: {}]
  %s4 = inlined_call_operand.vmem [shape: f32[4,1], index: 4, kind: input, shape index: {}]
  %s5 = inlined_call_operand.vmem [shape: f32[2,4,256], index: 5, kind: output, shape index: {}]
  %s6 = sld [smem:[#allocation0]]
  $region53: #{_mhsa_impl.1} parent=0
    _
  %s8 = ssub.s32 1, %s6
  %s9 = scalar_select 0, %s8, %s6
  loop: start=0, step=1, limit=4
  $region2: #{_mhsa_impl.1} parent=0 // loop_pre_header
    _
  $region3: #{_mhsa_impl.1} parent=0 // loop_header
    %s11 = sphi 0, %s15
    %p12 = scmp.ge.s32.totalorder %s11, 4
    %s18 = sphi 0, %s30
    %s19 = sphi 0, %s26
    %s20 = sphi 0, %s18
    %s21 = sphi 0, %s19
    %s22 = sphi 0, %s20
    %s23 = sphi 0, %s21
    %s35 = sphi 0, %s37
    %s38 = sphi 0, %s35
    %s39 = sphi 0, %s38
    %s55 = sphi 0, %s39
    %s59 = sphi 0, %s59
    %s61 = sphi 0, %s59
    %s62 = sphi 0, %s61
    %s76 = sphi 0, %s62
    %s80 = sphi 0, %s80
    %s82 = sphi 0, %s80
    %s83 = sphi 0, %s82
    %s97 = sphi 0, %s83
    %s101 = sphi 0, %s101
    %s103 = sphi 0, %s101
    %s104 = sphi 0, %s103
    %s118 = sphi 0, %s104
    %s122 = sphi 0, %s122
    %s124 = sphi 0, %s122
    %s125 = sphi 0, %s124
    %s139 = sphi 0, %s125
    %s147 = sphi 0, %s149
    %s150 = sphi 0, %s147
    %s151 = sphi 0, %s150
    %s167 = sphi 0, %s151
  $region4: #{_mhsa_impl.1} parent=0 // loop_header_branch
    %14 = sbr.rel (%p12) target = $region8
  $region5: #{_mhsa_impl.1} parent=0 // loop_body
    %s16 = ssub.s32 %s11, 1
    %s17 = ssub.s32 %s11, 2
    %s24 = sadd.s32 1, %s19
    %p25 = scmp.ge.s32.totalorder %s24, 1
    %s26 = scalar_select %p25, 0, %s24
    %s27 = sadd.s32 1, %s18
    %s28 = scalar_select %p25, %s27, %s18
    %p29 = scmp.ge.s32.totalorder %s28, 2
    %s30 = scalar_select %p29, 0, %s28
    %s31 = ssub.s32 %s18, %s30
    %s32 = ssub.s32 %s19, %s26
    %s33 = sor.u32 %s31, %s32
    %p34 = scmp.eq.s32.totalorder %s33, 0
    %s36 = sadd.s32 %s35, 1
    %s37 = scalar_select %p34, %s35, %s36
    %p40 = pneg %p34
    %p41 = scmp.eq.s32.totalorder %s11, 1
    %p42 = por %p40, %p41
    %p43 = scmp.ne.s32.totalorder %s35, %s38
    %p44 = scmp.eq.s32.totalorder %s11, 0
    %p45 = por %p43, %p44
    %p46 = scmp.ne.s32.totalorder %s35, %s38
    %p47 = scmp.eq.s32.totalorder %s16, 1
    %p48 = por %p46, %p47
    %p49 = scmp.ne.s32.totalorder %s38, %s39
    %p50 = scmp.eq.s32.totalorder %s16, 0
    %p51 = por %p49, %p50
    %p52 = scmp.ne.s32.totalorder %s38, %s39
    %p53 = scmp.eq.s32.totalorder %s17, 1
    %p54 = por %p52, %p53
    %p56 = scmp.ne.s32.totalorder %s39, %s55
    %p57 = scmp.eq.s32.totalorder %s17, 0
    %p58 = por %p56, %p57
    %s60 = sadd.s32 %s59, 1
    %p63 = scmp.eq.s32.totalorder %s11, 1
    %p64 = scmp.ne.s32.totalorder %s59, %s61
    %p65 = scmp.eq.s32.totalorder %s11, 0
    %p66 = por %p64, %p65
    %p67 = scmp.ne.s32.totalorder %s59, %s61
    %p68 = scmp.eq.s32.totalorder %s16, 1
    %p69 = por %p67, %p68
    %p70 = scmp.ne.s32.totalorder %s61, %s62
    %p71 = scmp.eq.s32.totalorder %s16, 0
    %p72 = por %p70, %p71
    %p73 = scmp.ne.s32.totalorder %s61, %s62
    %p74 = scmp.eq.s32.totalorder %s17, 1
    %p75 = por %p73, %p74
    %p77 = scmp.ne.s32.totalorder %s62, %s76
    %p78 = scmp.eq.s32.totalorder %s17, 0
    %p79 = por %p77, %p78
    %s81 = sadd.s32 %s80, 1
    %p84 = scmp.eq.s32.totalorder %s11, 1
    %p85 = scmp.ne.s32.totalorder %s80, %s82
    %p86 = scmp.eq.s32.totalorder %s11, 0
    %p87 = por %p85, %p86
    %p88 = scmp.ne.s32.totalorder %s80, %s82
    %p89 = scmp.eq.s32.totalorder %s16, 1
    %p90 = por %p88, %p89
    %p91 = scmp.ne.s32.totalorder %s82, %s83
    %p92 = scmp.eq.s32.totalorder %s16, 0
    %p93 = por %p91, %p92
    %p94 = scmp.ne.s32.totalorder %s82, %s83
    %p95 = scmp.eq.s32.totalorder %s17, 1
    %p96 = por %p94, %p95
    %p98 = scmp.ne.s32.totalorder %s83, %s97
    %p99 = scmp.eq.s32.totalorder %s17, 0
    %p100 = por %p98, %p99
    %s102 = sadd.s32 %s101, 1
    %p105 = scmp.eq.s32.totalorder %s11, 1
    %p106 = scmp.ne.s32.totalorder %s101, %s103
    %p107 = scmp.eq.s32.totalorder %s11, 0
    %p108 = por %p106, %p107
    %p109 = scmp.ne.s32.totalorder %s101, %s103
    %p110 = scmp.eq.s32.totalorder %s16, 1
    %p111 = por %p109, %p110
    %p112 = scmp.ne.s32.totalorder %s103, %s104
    %p113 = scmp.eq.s32.totalorder %s16, 0
    %p114 = por %p112, %p113
    %p115 = scmp.ne.s32.totalorder %s103, %s104
    %p116 = scmp.eq.s32.totalorder %s17, 1
    %p117 = por %p115, %p116
    %p119 = scmp.ne.s32.totalorder %s104, %s118
    %p120 = scmp.eq.s32.totalorder %s17, 0
    %p121 = por %p119, %p120
    %s123 = sadd.s32 %s122, 1
    %p126 = scmp.eq.s32.totalorder %s11, 1
    %p127 = scmp.ne.s32.totalorder %s122, %s124
    %p128 = scmp.eq.s32.totalorder %s11, 0
    %p129 = por %p127, %p128
    %p130 = scmp.ne.s32.totalorder %s122, %s124
    %p131 = scmp.eq.s32.totalorder %s16, 1
    %p132 = por %p130, %p131
    %p133 = scmp.ne.s32.totalorder %s124, %s125
    %p134 = scmp.eq.s32.totalorder %s16, 0
    %p135 = por %p133, %p134
    %p136 = scmp.ne.s32.totalorder %s124, %s125
    %p137 = scmp.eq.s32.totalorder %s17, 1
    %p138 = por %p136, %p137
    %p140 = scmp.ne.s32.totalorder %s125, %s139
    %p141 = scmp.eq.s32.totalorder %s17, 0
    %p142 = por %p140, %p141
    %s143 = ssub.s32 %s18, %s30
    %s144 = ssub.s32 %s19, %s26
    %s145 = sor.u32 %s143, %s144
    %p146 = scmp.eq.s32.totalorder %s145, 0
    %s148 = sadd.s32 %s147, 1
    %s149 = scalar_select %p146, %s147, %s148
    %p152 = pneg %p146
    %p153 = scmp.eq.s32.totalorder %s11, 1
    %p154 = por %p152, %p153
    %p155 = scmp.ne.s32.totalorder %s147, %s150
    %p156 = scmp.eq.s32.totalorder %s11, 0
    %p157 = por %p155, %p156
    %p158 = scmp.ne.s32.totalorder %s147, %s150
    %p159 = scmp.eq.s32.totalorder %s16, 1
    %p160 = por %p158, %p159
    %p161 = scmp.ne.s32.totalorder %s150, %s151
    %p162 = scmp.eq.s32.totalorder %s16, 0
    %p163 = por %p161, %p162
    %p164 = scmp.ne.s32.totalorder %s150, %s151
    %p165 = scmp.eq.s32.totalorder %s17, 1
    %p166 = por %p164, %p165
    %p168 = scmp.ne.s32.totalorder %s151, %s167
    %p169 = scmp.eq.s32.totalorder %s17, 0
    %p170 = por %p168, %p169
    %p171 = scmp.le.s32.totalorder 1, %s11
    %p172 = scmp.lt.s32.totalorder %s11, 3
    %p173 = pnand %p171, %p172
    %p174 = pneg %p173
    // Predicated region
    $region9: #{_mhsa_impl.1} parent=5 // pred_check
      _
    $region10: #{_mhsa_impl.1} parent=5 // pred_check_branch
      %176 = sbr.rel (%p173) target = $region12
    $region11: #{_mhsa_impl.1} parent=5 // pred_region
      %s177 = ssub.s32 %s11, 1
      // Predicated region
      $region13: #{_mhsa_impl.1} parent=11 // pred_check
        %p178 = pneg %p72
      $region14: #{_mhsa_impl.1} parent=11 // pred_check_branch
        %180 = sbr.rel (%p178) target = $region16
      $region15: #{_mhsa_impl.1} parent=11 // pred_region
        _
      $region16: #{_mhsa_impl.1} parent=11 // pred_fallthru
        _
      // Predicated region
      $region17: #{_mhsa_impl.1} parent=11 // pred_check
        %p181 = pneg %p93
      $region18: #{_mhsa_impl.1} parent=11 // pred_check_branch
        %183 = sbr.rel (%p181) target = $region20
      $region19: #{_mhsa_impl.1} parent=11 // pred_region
        _
      $region20: #{_mhsa_impl.1} parent=11 // pred_fallthru
        _
      // Predicated region
      $region21: #{_mhsa_impl.1} parent=11 // pred_check
        %p184 = pneg %p114
      $region22: #{_mhsa_impl.1} parent=11 // pred_check_branch
        %186 = sbr.rel (%p184) target = $region24
      $region23: #{_mhsa_impl.1} parent=11 // pred_region
        _
      $region24: #{_mhsa_impl.1} parent=11 // pred_fallthru
        _
      // Predicated region
      $region25: #{_mhsa_impl.1} parent=11 // pred_check
        %p187 = pneg %p135
      $region26: #{_mhsa_impl.1} parent=11 // pred_check_branch
        %189 = sbr.rel (%p187) target = $region28
      $region27: #{_mhsa_impl.1} parent=11 // pred_region
        _
      $region28: #{_mhsa_impl.1} parent=11 // pred_fallthru
        _
    $region12: #{_mhsa_impl.1} parent=5 // pred_fallthru
      _
    %p190 = scmp.lt.s32.totalorder %s11, 2
    // Predicated region
    $region29: #{_mhsa_impl.1} parent=5 // pred_check
      %p191 = pneg %p190
    $region30: #{_mhsa_impl.1} parent=5 // pred_check_branch
      %193 = sbr.rel (%p191) target = $region32
    $region31: #{_mhsa_impl.1} parent=5 // pred_region
      // Predicated region
      $region33: #{_mhsa_impl.1} parent=31 // pred_check
        %p194 = pneg %p45
      $region34: #{_mhsa_impl.1} parent=31 // pred_check_branch
        %196 = sbr.rel (%p194) target = $region36
      $region35: #{_mhsa_impl.1} parent=31 // pred_region
        %s197 = smul.u32 2, %s19
        %p198 = scmp.lt.s32.totalorder %s18, 1
        %s199 = scalar_select %p198, %s18, 1
        %p200 = scmp.lt.s32.totalorder %s197, 1
        %s201 = scalar_select %p200, %s197, 1
        %s202 = smul.addr %s199, 2
        %s203 = sadd.s32 %s201, %s202
        %s204 = smul.addr %s203, 4
        %s205 = scalar_lea.vmem %s0, %s204
        %s206 = smul.u32 2, %s19
      $region36: #{_mhsa_impl.1} parent=31 // pred_fallthru
        _
    $region32: #{_mhsa_impl.1} parent=5 // pred_fallthru
      _
    %p207 = scmp.le.s32.totalorder 1, %s11
    %p208 = scmp.lt.s32.totalorder %s11, 3
    %p209 = pnand %p207, %p208
    %p210 = pneg %p209
    // Predicated region
    $region37: #{_mhsa_impl.1} parent=5 // pred_check
      _
    $region38: #{_mhsa_impl.1} parent=5 // pred_check_branch
      %212 = sbr.rel (%p209) target = $region40
    $region39: #{_mhsa_impl.1} parent=5 // pred_region
      %s213 = ssub.s32 %s11, 1
      %s214 = smul.u32 2, %s21
      %p215 = scmp.lt.s32.totalorder %s20, 1
      %s216 = scalar_select %p215, %s20, 1
      %p217 = scmp.lt.s32.totalorder %s214, 1
      %s218 = scalar_select %p217, %s214, 1
      %s219 = smul.addr %s216, 2
      %s220 = sadd.s32 %s218, %s219
      %s221 = smul.addr %s220, 4
      %s222 = scalar_lea.vmem %s0, %s221
      %p223 = pneg %p51
      %p224 = pneg %p48
      %p225 = pneg %p72
      %p226 = pneg %p69
      %p227 = pneg %p93
      %p228 = pneg %p90
      %p229 = pneg %p114
      %p230 = pneg %p111
      %p231 = pneg %p135
      %p232 = pneg %p132
      %p233 = pneg %p163
      %p234 = pneg %p160
      %s235 = smul.u32 2, %s21
      %p236 = scmp.lt.s32.totalorder %s20, 1
      %s237 = scalar_select %p236, %s20, 1
      %p238 = scmp.lt.s32.totalorder %s235, 1
      %s239 = scalar_select %p238, %s235, 1
      %s240 = smul.addr %s237, 2
      %s241 = sadd.s32 %s239, %s240
      %s242 = smul.addr %s241, 4
      %s243 = scalar_lea.vmem %s5, %s242
      %s244 = smul.u32 2, %s21
      %p245 = scmp.lt.s32.totalorder %s20, 1
      %s246 = scalar_select %p245, %s20, 1
      %p247 = scmp.lt.s32.totalorder %s244, 1
      %s248 = scalar_select %p247, %s244, 1
      %s249 = smul.addr %s246, 2
      %s250 = sadd.s32 %s248, %s249
      %s251 = smul.addr %s250, 4
      %s252 = scalar_lea.vmem %s0, %s251
      %s253 = smul.u32 2, %s21
      %s254 = smul.u32 2, %s21
      %p255 = scmp.lt.s32.totalorder %s20, 1
      %s256 = scalar_select %p255, %s20, 1
      %p257 = scmp.lt.s32.totalorder %s254, 1
      %s258 = scalar_select %p257, %s254, 1
      %s259 = smul.addr %s256, 2
      %s260 = sadd.s32 %s258, %s259
      %s261 = smul.addr %s260, 4
      %s262 = scalar_lea.vmem %s5, %s261
      %s263 = smul.u32 2, %s21
      %v264 = vld [vmem:[%s252] sm:$0xff]
      %v265 = vld [vmem:[%s1] sm:$0xf]
      %267 = vset.pattern.permute.xlu0 0
      %268 = vperm.xlu0 %267, %v265
      %v269 = vpop.permute.xlu0 %268
      %v272 = vlaneseq
      %v273 = vshrl.u32 %v272, 7
      %v274 = vsub.s32 0, %v273
      %v275 = vrot.slane %v264, %v274
      %v276 = vlaneseq
      %v277 = vshrl.u32 %v276, 7
      %v278 = vsub.s32 4, %v277
      %v279 = vrot.slane %v264, %v278
      %v282 = vlaneseq
      %v283 = vshrl.u32 %v282, 7
      %v284 = vsub.s32 0, %v283
      %v285 = vrot.slane %v275, %v284
      %v286 = vlaneseq
      %v287 = vshrl.u32 %v286, 7
      %v288 = vsub.s32 0, %v287
      %v289 = vrot.slane %v279, %v288
      %v290 = vmul.f32 %v269, %v285
      %v291 = vmul.f32 %v269, %v289
      %292 = vset.pattern.permute.xlu0 1
      %293 = vperm.xlu0 %292, %v265
      %v294 = vpop.permute.xlu0 %293
      %v296 = vlaneseq
      %v297 = vshrl.u32 %v296, 7
      %v298 = vsub.s32 1, %v297
      %v299 = vrot.slane %v264, %v298
      %v300 = vlaneseq
      %v301 = vshrl.u32 %v300, 7
      %v302 = vsub.s32 5, %v301
      %v303 = vrot.slane %v264, %v302
      %v306 = vlaneseq
      %v307 = vshrl.u32 %v306, 7
      %v308 = vsub.s32 1, %v307
      %v309 = vrot.slane %v299, %v308
      %v310 = vlaneseq
      %v311 = vshrl.u32 %v310, 7
      %v312 = vsub.s32 1, %v311
      %v313 = vrot.slane %v303, %v312
      %v314 = vmul.f32 %v294, %v309
      %v315 = vmul.f32 %v294, %v313
      %v316 = vadd.f32 %v290, %v314
      %v317 = vadd.f32 %v291, %v315
      %318 = vset.pattern.permute.xlu0 2
      %319 = vperm.xlu0 %318, %v265
      %v320 = vpop.permute.xlu0 %319
      %v322 = vlaneseq
      %v323 = vshrl.u32 %v322, 7
      %v324 = vsub.s32 2, %v323
      %v325 = vrot.slane %v264, %v324
      %v326 = vlaneseq
      %v327 = vshrl.u32 %v326, 7
      %v328 = vsub.s32 6, %v327
      %v329 = vrot.slane %v264, %v328
      %v332 = vlaneseq
      %v333 = vshrl.u32 %v332, 7
      %v334 = vsub.s32 2, %v333
      %v335 = vrot.slane %v325, %v334
      %v336 = vlaneseq
      %v337 = vshrl.u32 %v336, 7
      %v338 = vsub.s32 2, %v337
      %v339 = vrot.slane %v329, %v338
      %v340 = vmul.f32 %v320, %v335
      %v341 = vmul.f32 %v320, %v339
      %v342 = vadd.f32 %v316, %v340
      %v343 = vadd.f32 %v317, %v341
      %344 = vset.pattern.permute.xlu0 3
      %345 = vperm.xlu0 %344, %v265
      %v346 = vpop.permute.xlu0 %345
      %v348 = vlaneseq
      %v349 = vshrl.u32 %v348, 7
      %v350 = vsub.s32 3, %v349
      %v351 = vrot.slane %v264, %v350
      %v352 = vlaneseq
      %v353 = vshrl.u32 %v352, 7
      %v354 = vsub.s32 7, %v353
      %v355 = vrot.slane %v264, %v354
      %v358 = vlaneseq
      %v359 = vshrl.u32 %v358, 7
      %v360 = vsub.s32 3, %v359
      %v361 = vrot.slane %v351, %v360
      %v362 = vlaneseq
      %v363 = vshrl.u32 %v362, 7
      %v364 = vsub.s32 3, %v363
      %v365 = vrot.slane %v355, %v364
      %v366 = vmul.f32 %v346, %v361
      %v367 = vmul.f32 %v346, %v365
      %v368 = vadd.f32 %v342, %v366
      %v369 = vadd.f32 %v343, %v367
      %v370 = vld [vmem:[%s2] sm:$0xf]
      %372 = vset.pattern.permute.xlu0 0
      %373 = vperm.xlu0 %372, %v370
      %v374 = vpop.permute.xlu0 %373
      %v376 = vadd.f32 %v368, %v374
      %v377 = vadd.f32 %v369, %v374
      %v378 = vmax.f32 %v376, 0.0
      %v379 = vmax.f32 %v377, 0.0
      %v380 = vld [vmem:[%s3] sm:$0xf]
      %382 = vset.pattern.permute.xlu0 0
      %383 = vperm.xlu0 %382, %v380
      %v384 = vpop.permute.xlu0 %383
      %v386 = vlaneseq
      %v387 = vshrl.u32 %v386, 7
      %v388 = vsub.s32 0, %v387
      %v389 = vrot.slane %v378, %v388
      %v390 = vlaneseq
      %v391 = vshrl.u32 %v390, 7
      %v392 = vsub.s32 0, %v391
      %v393 = vrot.slane %v379, %v392
      %v394 = vmul.f32 %v384, %v389
      %v395 = vmul.f32 %v384, %v393
      %396 = vset.pattern.permute.xlu0 1
      %397 = vperm.xlu0 %396, %v380
      %v398 = vpop.permute.xlu0 %397
      %v400 = vlaneseq
      %v401 = vshrl.u32 %v400, 7
      %v402 = vsub.s32 1, %v401
      %v403 = vrot.slane %v378, %v402
      %v404 = vlaneseq
      %v405 = vshrl.u32 %v404, 7
      %v406 = vsub.s32 1, %v405
      %v407 = vrot.slane %v379, %v406
      %v408 = vmul.f32 %v398, %v403
      %v409 = vmul.f32 %v398, %v407
      %v410 = vadd.f32 %v394, %v408
      %v411 = vadd.f32 %v395, %v409
      %412 = vset.pattern.permute.xlu0 2
      %413 = vperm.xlu0 %412, %v380
      %v414 = vpop.permute.xlu0 %413
      %v416 = vlaneseq
      %v417 = vshrl.u32 %v416, 7
      %v418 = vsub.s32 2, %v417
      %v419 = vrot.slane %v378, %v418
      %v420 = vlaneseq
      %v421 = vshrl.u32 %v420, 7
      %v422 = vsub.s32 2, %v421
      %v423 = vrot.slane %v379, %v422
      %v424 = vmul.f32 %v414, %v419
      %v425 = vmul.f32 %v414, %v423
      %v426 = vadd.f32 %v410, %v424
      %v427 = vadd.f32 %v411, %v425
      %428 = vset.pattern.permute.xlu0 3
      %429 = vperm.xlu0 %428, %v380
      %v430 = vpop.permute.xlu0 %429
      %v432 = vlaneseq
      %v433 = vshrl.u32 %v432, 7
      %v434 = vsub.s32 3, %v433
      %v435 = vrot.slane %v378, %v434
      %v436 = vlaneseq
      %v437 = vshrl.u32 %v436, 7
      %v438 = vsub.s32 3, %v437
      %v439 = vrot.slane %v379, %v438
      %v440 = vmul.f32 %v430, %v435
      %v441 = vmul.f32 %v430, %v439
      %v442 = vadd.f32 %v426, %v440
      %v443 = vadd.f32 %v427, %v441
      %v444 = vld [vmem:[%s4] sm:$0xf]
      %446 = vset.pattern.permute.xlu0 0
      %447 = vperm.xlu0 %446, %v444
      %v448 = vpop.permute.xlu0 %447
      %v450 = vadd.f32 %v442, %v448
      %v451 = vadd.f32 %v443, %v448
      %v452 = vxor.u32 %v450, 2147483648
      %v453 = vxor.u32 %v451, 2147483648
      %v454 = vmul.f32 %v452, 1.442695
      %v455 = vpow.pop %v454
      %v456 = vmul.f32 %v453, 1.442695
      %v457 = vpow.pop %v456
      %v458 = vadd.f32 %v455, 1.0
      %v459 = vadd.f32 %v457, 1.0
      %v460 = vrcp.pop %v458
      %v461 = vmul.f32 1.0, %v460
      %v462 = vrcp.pop %v459
      %v463 = vmul.f32 1.0, %v462
      %v466 = vcombine.low %v461, %v463
      %v468 = vmul.f32 %v264, %v466
      %469 = vst [vmem:[%s262] sm:$0xff] %v468
      %s470 = smul.u32 2, %s21
      %p471 = scmp.lt.s32.totalorder %s20, 1
      %s472 = scalar_select %p471, %s20, 1
      %p473 = scmp.lt.s32.totalorder %s470, 1
      %s474 = scalar_select %p473, %s470, 1
      %s475 = smul.addr %s472, 2
      %s476 = sadd.s32 %s474, %s475
      %s477 = smul.addr %s476, 4
      %s478 = scalar_lea.vmem %s5, %s477
      // Predicated region
      $region41: #{_mhsa_impl.1} parent=39 // pred_check
        %p479 = pneg %p160
      $region42: #{_mhsa_impl.1} parent=39 // pred_check_branch
        %481 = sbr.rel (%p479) target = $region44
      $region43: #{_mhsa_impl.1} parent=39 // pred_region
        %s482 = smul.u32 2, %s21
      $region44: #{_mhsa_impl.1} parent=39 // pred_fallthru
        _
    $region40: #{_mhsa_impl.1} parent=5 // pred_fallthru
      _
    %p483 = scmp.le.s32.totalorder 2, %s11
    // Predicated region
    $region45: #{_mhsa_impl.1} parent=5 // pred_check
      %p484 = pneg %p483
    $region46: #{_mhsa_impl.1} parent=5 // pred_check_branch
      %486 = sbr.rel (%p484) target = $region48
    $region47: #{_mhsa_impl.1} parent=5 // pred_region
      %s487 = ssub.s32 %s11, 2
      // Predicated region
      $region49: #{_mhsa_impl.1} parent=47 // pred_check
        %p488 = pneg %p166
      $region50: #{_mhsa_impl.1} parent=47 // pred_check_branch
        %490 = sbr.rel (%p488) target = $region52
      $region51: #{_mhsa_impl.1} parent=47 // pred_region
        %s491 = smul.u32 2, %s23
        %p492 = scmp.lt.s32.totalorder %s22, 1
        %s493 = scalar_select %p492, %s22, 1
        %p494 = scmp.lt.s32.totalorder %s491, 1
        %s495 = scalar_select %p494, %s491, 1
        %s496 = smul.addr %s493, 2
        %s497 = sadd.s32 %s495, %s496
        %s498 = smul.addr %s497, 4
        %s499 = scalar_lea.vmem %s5, %s498
      $region52: #{_mhsa_impl.1} parent=47 // pred_fallthru
        _
    $region48: #{_mhsa_impl.1} parent=5 // pred_fallthru
      _
  $region6: #{_mhsa_impl.1} parent=0 // loop_footer
    %s15 = sadd.s32 1, %s11
  $region7: #{_mhsa_impl.1} parent=0 // loop_footer_branch
    %10 = sbr.rel target = $region3
  $region8: #{_mhsa_impl.1} parent=0 // loop_exit
    _

</llo_original>
